<compile_context>
chip_gen: v7x
topology: tpu7x:2x2x1
jax: 0.10.0
libtpu: 0.0.40
codegen_flags: <defaults>
</compile_context>

<pallas_src>
import functools

import jax
import jax.numpy as jnp
from jax.experimental import pallas as pl
from jax.experimental.pallas import tpu as pltpu


def _round_up(a, m):
    return ((a + m - 1) // m) * m


def encoder_info2_kernel(x_ref, w1_ref, b1_ref, wh_ref, bh_ref, out_ref, *,
                         out_dim, head_split):
    """One batch tile: ReLU(x@W1+b1) -> fused [mu|logvar] matmul -> sigma."""
    # Hidden layer (MXU matmul, f32 accumulation) + bias + ReLU, all in VMEM.
    x = x_ref[...].astype(w1_ref.dtype)
    h = jnp.dot(x, w1_ref[...], preferred_element_type=jnp.float32) + b1_ref[...]
    h = jnp.maximum(h, 0.0)
    # TODO(synk): Dropout(drop_rate=0.0) is an identity; drop_rate > 0 would
    # need pltpu.prng_seed / pltpu.prng_random_bits masking here.

    # Fused heads: one MXU pass over h, one lane-dense (multiple-of-128) store.
    y = jnp.dot(h.astype(wh_ref.dtype), wh_ref[...],
                preferred_element_type=jnp.float32) + bh_ref[...]

    if head_split is None:
        # 2*out_dim <= 128: mu and logvar share a single 128-lane vreg column.
        # NOTE: exp(0.5*y) also evaluates on mu/padding lanes before the select;
        # benign (values discarded, no NaN propagation) -- one EUP pass, no
        # extra select.  Don't "fix" this.
        lane = jax.lax.broadcasted_iota(jnp.int32, y.shape, 1)
        is_logvar = (lane >= out_dim) & (lane < 2 * out_dim)
        out_ref[...] = jnp.where(is_logvar, jnp.exp(0.5 * y), y).astype(out_ref.dtype)
    else:
        # Heads packed into separate 128-lane-multiple slabs: exp only on the
        # logvar slab (halves EUP work), no iota/compare/select.
        out_ref[:, :head_split] = y[:, :head_split].astype(out_ref.dtype)
        out_ref[:, head_split:] = jnp.exp(0.5 * y[:, head_split:]).astype(out_ref.dtype)


def pack_encoder_info2_params(w1, b1, wmu, bmu, wlv, blv, *,
                              compute_dtype=jnp.float32):
    """Pack the mu/logvar heads into ONE lane-dense weight slab.

    Call this ONCE at init and reuse the result: packing per forward call
    would re-materialize and re-read a (hid, P) slab through HBM every step.
    compute_dtype=jnp.bfloat16 trades ~1e-2 accuracy for ~3x MXU throughput on
    v6e/v7x (accumulation stays f32); default f32 holds the 1e-5 check.
    """
    hid, out_dim = wmu.shape
    if 2 * out_dim <= 128:
        P, head_split = 128, None
        wh = jnp.zeros((hid, P), jnp.float32)
        wh = wh.at[:, :out_dim].set(wmu).at[:, out_dim:2 * out_dim].set(wlv)
        bh = jnp.zeros((1, P), jnp.float32)
        bh = bh.at[0, :out_dim].set(bmu).at[0, out_dim:2 * out_dim].set(blv)
    else:
        # Large heads: pad each head separately to a 128-lane multiple so the
        # kernel can exp() only the logvar slab with a static slice.
        Pm = _round_up(out_dim, 128)
        P, head_split = 2 * Pm, Pm
        wh = jnp.zeros((hid, P), jnp.float32)
        wh = wh.at[:, :out_dim].set(wmu).at[:, Pm:Pm + out_dim].set(wlv)
        bh = jnp.zeros((1, P), jnp.float32)
        bh = bh.at[0, :out_dim].set(bmu).at[0, Pm:Pm + out_dim].set(blv)
    return {
        "w1": w1.astype(compute_dtype),
        "b1": b1.reshape(1, hid).astype(jnp.float32),
        "wh": wh.astype(compute_dtype),
        "bh": bh.astype(jnp.float32),
        "out_dim": out_dim,
        "head_split": head_split,
    }


@functools.partial(
    jax.jit,
    static_argnames=("out_dim", "head_split", "tb_max", "vmem_budget_bytes"))
def encoder_info2_forward(x, w1, b1, wh, bh, *, out_dim, head_split,
                          tb_max=256, vmem_budget_bytes=24 * 1024 * 1024):
    """x: (B, in_dim) f32.  Returns (mu, sigma), each (B, out_dim) f32."""
    B, in_dim = x.shape
    hid = w1.shape[1]
    P = wh.shape[1]
    itemsize = jnp.dtype(w1.dtype).itemsize

    # --- batch-tile selection from an explicit VMEM budget -------------------
    # Resident weights are single-buffered (pl.Buffered(1)); the x / out tiles
    # are double-buffered by the pipeline.
    weight_bytes = itemsize * (in_dim * hid + hid * P) + 4 * (hid + P)
    per_row_bytes = 2 * (4 * in_dim + 4 * P)        # x tile + out tile, 2 bufs each
    tb_fit = max(8, ((vmem_budget_bytes - weight_bytes) // per_row_bytes) // 8 * 8)
    tb_two = _round_up(pl.cdiv(B, 2), 8)            # >=2 grid steps when B > 8 (v7x 2 TCs)
    TB = max(8, min(tb_max, tb_fit, tb_two, _round_up(B, 8)))
    B_pad = _round_up(B, TB)
    if B_pad != B:
        x = jnp.pad(x, ((0, B_pad - B), (0, 0)))
    grid = (B_pad // TB,)

    vmem_needed = weight_bytes + TB * per_row_bytes
    vmem_limit = int(min(max(vmem_needed + (4 << 20), 8 << 20), 32 << 20))

    n_trans = P if head_split is None else (P - head_split)
    cost = pl.CostEstimate(
        flops=2 * B_pad * (in_dim * hid + hid * P),
        transcendentals=B_pad * n_trans,
        bytes_accessed=(4 * B_pad * (in_dim + P)
                        + itemsize * (in_dim * hid + hid * P) + 4 * (hid + P)))

    kernel = functools.partial(encoder_info2_kernel,
                               out_dim=out_dim, head_split=head_split)
    resident = pl.Buffered(1)   # constant index_map -> never re-fetched

    out = pl.pallas_call(
        kernel,
        out_shape=jax.ShapeDtypeStruct((B_pad, P), jnp.float32),
        grid=grid,
        in_specs=[
            pl.BlockSpec((TB, in_dim), lambda i: (i, 0)),                            # x (tiled)
            pl.BlockSpec((in_dim, hid), lambda i: (0, 0), pipeline_mode=resident),   # W1
            pl.BlockSpec((1, hid), lambda i: (0, 0), pipeline_mode=resident),        # b1
            pl.BlockSpec((hid, P), lambda i: (0, 0), pipeline_mode=resident),        # packed heads
            pl.BlockSpec((1, P), lambda i: (0, 0), pipeline_mode=resident),          # packed biases
        ],
        # Lane-dense output slab (P multiple of 128) -> unmasked full-width vst.
        # (For tiny out_dim this writes padded lanes; lane-dense stores beat the
        # masked-vst alternative in practice, and mu/sigma are sliced out below.)
        out_specs=pl.BlockSpec((TB, P), lambda i: (i, 0)),
        compiler_params=pltpu.CompilerParams(
            dimension_semantics=("parallel",),
            vmem_limit_bytes=vmem_limit,
        ),
        cost_estimate=cost,
    )(x, w1, b1, wh, bh)

    mu = out[:B, :out_dim]
    lv_start = out_dim if head_split is None else head_split
    sigma = out[:B, lv_start:lv_start + out_dim]
    return mu, sigma


def init_params(key, in_dim, out_dim, n_h=128):
    """Deterministic synthetic init (PyTorch Linear shapes, stored
    pre-transposed as (in_features, out_features))."""
    hid = n_h * 2
    k1, k2, k3, k4, k5, k6 = jax.random.split(key, 6)
    s1 = 1.0 / jnp.sqrt(in_dim)
    s2 = 1.0 / jnp.sqrt(hid)
    w1 = jax.random.uniform(k1, (in_dim, hid), jnp.float32, -s1, s1)
    b1 = jax.random.uniform(k2, (hid,), jnp.float32, -s1, s1)
    wmu = jax.random.uniform(k3, (hid, out_dim), jnp.float32, -s2, s2)
    bmu = jax.random.uniform(k4, (out_dim,), jnp.float32, -s2, s2)
    wlv = jax.random.uniform(k5, (hid, out_dim), jnp.float32, -s2, s2)
    blv = jax.random.uniform(k6, (out_dim,), jnp.float32, -s2, s2)
    return w1, b1, wmu, bmu, wlv, blv


if __name__ == "__main__":
    key = jax.random.PRNGKey(0)
    kx, kp = jax.random.split(key)

    batch, in_dim, out_dim = 8, 32, 16
    x = jax.random.normal(kx, (batch, in_dim), jnp.float32)
    w1, b1, wmu, bmu, wlv, blv = init_params(kp, in_dim, out_dim)

    # Pack the head weights ONCE (hoisted out of the per-call path).
    packed = pack_encoder_info2_params(w1, b1, wmu, bmu, wlv, blv)

    mu, sigma = encoder_info2_forward(
        x, packed["w1"], packed["b1"], packed["wh"], packed["bh"],
        out_dim=packed["out_dim"], head_split=packed["head_split"])
    jax.block_until_ready((mu, sigma))

    # Reference check in plain JAX.
    h_ref = jnp.maximum(x @ w1 + b1, 0.0)
    mu_ref = h_ref @ wmu + bmu
    sigma_ref = jnp.exp(0.5 * (h_ref @ wlv + blv))
    assert mu.shape == (batch, out_dim) and sigma.shape == (batch, out_dim)
    assert jnp.allclose(mu, mu_ref, atol=1e-5, rtol=1e-5)
    assert jnp.allclose(sigma, sigma_ref, atol=1e-5, rtol=1e-5)

    print("KERNEL_OK")
</pallas_src>

<mosaic_0001>
module attributes {stable_mosaic.version = 11 : i64} {
  func.func @encoder_info2_kernel(%arg0: i32, %arg1: memref<8x32xf32, #tpu.memory_space<vmem>>, %arg2: memref<32x256xf32, #tpu.memory_space<vmem>>, %arg3: memref<1x256xf32, #tpu.memory_space<vmem>>, %arg4: memref<256x128xf32, #tpu.memory_space<vmem>>, %arg5: memref<1x128xf32, #tpu.memory_space<vmem>>, %arg6: memref<8x128xf32, #tpu.memory_space<vmem>>) attributes {dimension_semantics = [#tpu.dimension_semantics<parallel>], iteration_bounds = array<i64: 1>, scalar_prefetch = 0 : i64, scratch_operands = 0 : i64, tpu.core_type = #tpu.core_type<tc>, window_params = [{transform_indices = @transform_0, window_bounds = array<i64: 8, 32>}, {pipeline_mode = #tpu.pipeline_mode<synchronous>, transform_indices = @transform_1, window_bounds = array<i64: 32, 256>}, {pipeline_mode = #tpu.pipeline_mode<synchronous>, transform_indices = @transform_2, window_bounds = array<i64: 1, 256>}, {pipeline_mode = #tpu.pipeline_mode<synchronous>, transform_indices = @transform_3, window_bounds = array<i64: 256, 128>}, {pipeline_mode = #tpu.pipeline_mode<synchronous>, transform_indices = @transform_4, window_bounds = array<i64: 1, 128>}, {transform_indices = @transform_5, window_bounds = array<i64: 8, 128>}]} {
    %c0 = arith.constant 0 : index
    %c0_0 = arith.constant 0 : index
    %0 = vector.load %arg1[%c0, %c0_0] : memref<8x32xf32, #tpu.memory_space<vmem>>, vector<8x32xf32>
    %c0_1 = arith.constant 0 : index
    %c0_2 = arith.constant 0 : index
    %1 = vector.load %arg2[%c0_1, %c0_2] : memref<32x256xf32, #tpu.memory_space<vmem>>, vector<32x256xf32>
    %cst = arith.constant dense<0.000000e+00> : vector<8x256xf32>
    %2 = tpu.matmul %0, %1, %cst {dimension_numbers = #tpu.dot_dimension_numbers<[1], [0], [0], [1], [0, 0, 1, 1], [], []>} : vector<8x32xf32>, vector<32x256xf32>, vector<8x256xf32> -> vector<8x256xf32>
    %c0_3 = arith.constant 0 : index
    %c0_4 = arith.constant 0 : index
    %3 = vector.load %arg3[%c0_3, %c0_4] : memref<1x256xf32, #tpu.memory_space<vmem>>, vector<1x256xf32>
    %4 = vector.broadcast %3 : vector<1x256xf32> to vector<8x256xf32>
    %5 = arith.addf %2, %4 : vector<8x256xf32>
    %cst_5 = arith.constant 0.000000e+00 : f32
    %6 = vector.broadcast %cst_5 : f32 to vector<8x256xf32>
    %7 = arith.maximumf %5, %6 : vector<8x256xf32>
    %c0_6 = arith.constant 0 : index
    %c0_7 = arith.constant 0 : index
    %8 = vector.load %arg4[%c0_6, %c0_7] : memref<256x128xf32, #tpu.memory_space<vmem>>, vector<256x128xf32>
    %cst_8 = arith.constant dense<0.000000e+00> : vector<8x128xf32>
    %9 = tpu.matmul %7, %8, %cst_8 {dimension_numbers = #tpu.dot_dimension_numbers<[1], [0], [0], [1], [0, 0, 1, 1], [], []>} : vector<8x256xf32>, vector<256x128xf32>, vector<8x128xf32> -> vector<8x128xf32>
    %c0_9 = arith.constant 0 : index
    %c0_10 = arith.constant 0 : index
    %10 = vector.load %arg5[%c0_9, %c0_10] : memref<1x128xf32, #tpu.memory_space<vmem>>, vector<1x128xf32>
    %11 = vector.broadcast %10 : vector<1x128xf32> to vector<8x128xf32>
    %12 = arith.addf %9, %11 : vector<8x128xf32>
    %13 = tpu.iota {dimensions = array<i32: 1>} : vector<8x128xi32>
    %c16_i32 = arith.constant 16 : i32
    %14 = vector.broadcast %c16_i32 : i32 to vector<8x128xi32>
    %15 = arith.cmpi sge, %13, %14 : vector<8x128xi32>
    %c32_i32 = arith.constant 32 : i32
    %16 = vector.broadcast %c32_i32 : i32 to vector<8x128xi32>
    %17 = arith.cmpi slt, %13, %16 : vector<8x128xi32>
    %18 = arith.andi %15, %17 : vector<8x128xi1>
    %cst_11 = arith.constant 5.000000e-01 : f32
    %19 = vector.broadcast %cst_11 : f32 to vector<8x128xf32>
    %20 = arith.mulf %19, %12 : vector<8x128xf32>
    %21 = math.exp %20 : vector<8x128xf32>
    %22 = arith.select %18, %21, %12 : vector<8x128xi1>, vector<8x128xf32>
    %c0_12 = arith.constant 0 : index
    %c0_13 = arith.constant 0 : index
    %23 = vector.load %arg6[%c0_12, %c0_13] : memref<8x128xf32, #tpu.memory_space<vmem>>, vector<8x128xf32>
    tpu.vector_store %arg6[%c0_12, %c0_13], %22 {strides = array<i32>} : memref<8x128xf32, #tpu.memory_space<vmem>>, vector<8x128xf32>,
    return
  }
  func.func @transform_0(%arg0: i32) -> (i32, i32) {
    %c0_i32 = arith.constant 0 : i32
    %c0_i32_0 = arith.constant 0 : i32
    return %arg0, %c0_i32 : i32, i32
  }
  func.func @transform_1(%arg0: i32) -> (i32, i32) {
    %c0_i32 = arith.constant 0 : i32
    %c0_i32_0 = arith.constant 0 : i32
    %c0_i32_1 = arith.constant 0 : i32
    return %c0_i32, %c0_i32_0 : i32, i32
  }
  func.func @transform_2(%arg0: i32) -> (i32, i32) {
    %c0_i32 = arith.constant 0 : i32
    %c0_i32_0 = arith.constant 0 : i32
    %c0_i32_1 = arith.constant 0 : i32
    return %c0_i32, %c0_i32_0 : i32, i32
  }
  func.func @transform_3(%arg0: i32) -> (i32, i32) {
    %c0_i32 = arith.constant 0 : i32
    %c0_i32_0 = arith.constant 0 : i32
    %c0_i32_1 = arith.constant 0 : i32
    return %c0_i32, %c0_i32_0 : i32, i32
  }
  func.func @transform_4(%arg0: i32) -> (i32, i32) {
    %c0_i32 = arith.constant 0 : i32
    %c0_i32_0 = arith.constant 0 : i32
    %c0_i32_1 = arith.constant 0 : i32
    return %c0_i32, %c0_i32_0 : i32, i32
  }
  func.func @transform_5(%arg0: i32) -> (i32, i32) {
    %c0_i32 = arith.constant 0 : i32
    %c0_i32_0 = arith.constant 0 : i32
    return %arg0, %c0_i32 : i32, i32
  }
}

</mosaic_0001>

<llo_original>
// kernel: encoder_info2_forward.1
$region0: #{encoder_info2_forward.1}
  #allocation0 [shape = 'u32[]', space=smem, size = 0x4, offset = 0x4, fixed_abs, tag = 'smem constant byte address 0x4 - core index']
  #allocation1 [shape = 'u32[144,128]{1,0:T(1,128)}', space=vmem, size = 0x12000, scoped, tag = 'internal scratch']
  %s0 = inlined_call_operand.hbm [shape: f32[8,32], index: 0, kind: input, shape index: {}]
  %s1 = inlined_call_operand.hbm [shape: f32[32,256], index: 1, kind: input, shape index: {}]
  %s2 = inlined_call_operand.vmem [shape: f32[1,256], index: 2, kind: input, shape index: {}]
  %s3 = inlined_call_operand.hbm [shape: f32[256,128], index: 3, kind: input, shape index: {}]
  %s4 = inlined_call_operand.vmem [shape: f32[1,128], index: 4, kind: input, shape index: {}]
  %s5 = inlined_call_operand.vmem [shape: f32[8,128], index: 5, kind: output, shape index: {}]
  %s6 = sld [smem:[#allocation0]]
  $region42: #{encoder_info2_forward.1} parent=0
    _
  %s8 = ssub.s32 1, %s6
  %s9 = scalar_select 0, %s8, %s6
  $region1: #{encoder_info2_forward.1} parent=0
    #allocation2 [shape = 'u8[4096]{0}', space=vmem, size = 0x1000, scoped, tag = 'input window, operand 0, single buffered']
    #allocation3 [shape = 's32[1]{0}', space=sflag, size = 0x4, scoped, tag = 'scoped memory for encoder_info2_forward.1']
    #allocation4 [shape = 'u8[32768]{0}', space=vmem, size = 0x8000, scoped, tag = 'input window, operand 1, single buffered']
    #allocation5 [shape = 's32[1]{0}', space=sflag, size = 0x4, scoped, tag = 'scoped memory for encoder_info2_forward.1']
    #allocation6 [shape = 'u8[131072]{0}', space=vmem, size = 0x20000, scoped, tag = 'input window, operand 3, single buffered']
    %10 = vsyncpa [#allocation3], 0
    %11 = vsyncpa [#allocation5], 0
    // Predicated region
    $region2: #{encoder_info2_forward.1} parent=1 // pred_check
      _
    $region3: #{encoder_info2_forward.1} parent=1 // pred_check_branch
      %13 = sbr.rel (0) target = $region5
    $region4: #{encoder_info2_forward.1} parent=1 // pred_region
      %s15 = ssub.s32 128, 128
      %16 = vsyncadd [#allocation3], %s15
      %s18 = sshll.u32 [#allocation2], 4
      %s19 = int_to_ptr.vmem [resolvable:$true] %s18
      %21 = dma.hbm_to_vmem [thread:$0]  %s0, 128, %s19, [#allocation3]
    $region5: #{encoder_info2_forward.1} parent=1 // pred_fallthru
      _
    // Predicated region
    $region6: #{encoder_info2_forward.1} parent=1 // pred_check
      _
    $region7: #{encoder_info2_forward.1} parent=1 // pred_check_branch
      %23 = sbr.rel (0) target = $region9
    $region8: #{encoder_info2_forward.1} parent=1 // pred_region
      %s25 = ssub.s32 1024, 1024
      %26 = vsyncadd [#allocation5], %s25
      %s27 = sshll.u32 [#allocation4], 4
      %s28 = int_to_ptr.vmem [resolvable:$true] %s27
      %33 = dma.hbm_to_vmem [thread:$0]  %s1, 1024, %s28, [#allocation5], 256, 256, 16
    $region9: #{encoder_info2_forward.1} parent=1 // pred_fallthru
      _
    // Predicated region
    $region10: #{encoder_info2_forward.1} parent=1 // pred_check
      _
    $region11: #{encoder_info2_forward.1} parent=1 // pred_check_branch
      %35 = sbr.rel (0) target = $region13
    $region12: #{encoder_info2_forward.1} parent=1 // pred_region
      _
    $region13: #{encoder_info2_forward.1} parent=1 // pred_fallthru
      _
    // Predicated region
    $region14: #{encoder_info2_forward.1} parent=1 // pred_check
      _
    $region15: #{encoder_info2_forward.1} parent=1 // pred_check_branch
      %37 = sbr.rel (0) target = $region17
    $region16: #{encoder_info2_forward.1} parent=1 // pred_region
      %s39 = ssub.s32 4096, 4096
      %40 = vsyncadd [#allocation5], %s39
      %s41 = sshll.u32 [#allocation6], 4
      %s42 = int_to_ptr.vmem [resolvable:$true] %s41
      %47 = dma.hbm_to_vmem [thread:$0]  %s3, 4096, %s42, [#allocation5], 128, 128, 8
    $region17: #{encoder_info2_forward.1} parent=1 // pred_fallthru
      _
    // Predicated region
    $region18: #{encoder_info2_forward.1} parent=1 // pred_check
      _
    $region19: #{encoder_info2_forward.1} parent=1 // pred_check_branch
      %49 = sbr.rel (0) target = $region21
    $region20: #{encoder_info2_forward.1} parent=1 // pred_region
      _
    $region21: #{encoder_info2_forward.1} parent=1 // pred_fallthru
      _
    // Predicated region
    $region22: #{encoder_info2_forward.1} parent=1 // pred_check
      _
    $region23: #{encoder_info2_forward.1} parent=1 // pred_check_branch
      %51 = sbr.rel (0) target = $region25
    $region24: #{encoder_info2_forward.1} parent=1 // pred_region
      %52 = dma.done [#allocation3], 128
    $region25: #{encoder_info2_forward.1} parent=1 // pred_fallthru
      _
    // Predicated region
    $region26: #{encoder_info2_forward.1} parent=1 // pred_check
      _
    $region27: #{encoder_info2_forward.1} parent=1 // pred_check_branch
      %54 = sbr.rel (0) target = $region29
    $region28: #{encoder_info2_forward.1} parent=1 // pred_region
      %55 = dma.done [#allocation5], 1024
    $region29: #{encoder_info2_forward.1} parent=1 // pred_fallthru
      _
    // Predicated region
    $region30: #{encoder_info2_forward.1} parent=1 // pred_check
      _
    $region31: #{encoder_info2_forward.1} parent=1 // pred_check_branch
      %57 = sbr.rel (0) target = $region33
    $region32: #{encoder_info2_forward.1} parent=1 // pred_region
      %58 = dma.done [#allocation5], 4096
    $region33: #{encoder_info2_forward.1} parent=1 // pred_fallthru
      _
    %v59 = vld [vmem:[#allocation2] sm:$0xff]
    %v60 = vld [vmem:[#allocation4] sm:$0xff]
    %v61 = vld [vmem:[#allocation4 + $0x8] sm:$0xff]
    %v62 = vld [vmem:[#allocation4 + $0x10] sm:$0xff]
    %v63 = vld [vmem:[#allocation4 + $0x18] sm:$0xff]
    %v64 = vld [vmem:[#allocation4 + $0x20] sm:$0xff]
    %v65 = vld [vmem:[#allocation4 + $0x28] sm:$0xff]
    %v66 = vld [vmem:[#allocation4 + $0x30] sm:$0xff]
    %v67 = vld [vmem:[#allocation4 + $0x38] sm:$0xff]
    %v68 = vld [vmem:[%s2] sm:$0x3]
    %v70 = vlaneseq
    %v71 = vshrl.u32 %v70, 7
    %v72 = vsub.s32 0, %v71
    %v73 = vrot.slane %v68, %v72
    %v74 = vlaneseq
    %v75 = vshrl.u32 %v74, 7
    %v76 = vsub.s32 1, %v75
    %v77 = vrot.slane %v68, %v76
    %vm80 = vcmask 261120
    %v82 = vsel %vm80, %v59, 0
    %84 = vmatprep.subr.mxu0 %v61
    %85 = vmatpush1.msra.mxu0 %v60
    %86 = vmatprep.subr.mxu0 %v63
    %87 = vmatpush1.msra.mxu0 %v62
    %88 = vmatprep.subr.mxu0 %v65
    %89 = vmatpush1.msra.mxu0 %v64
    %90 = vmatprep.subr.mxu0 %v67
    %91 = vmatpush1.msra.mxu0 %v66
    %92 = vmatprep.subr.mxu0 0.0
    %93 = vmatpush1.msra.mxu0 0.0
    %94 = vmatprep.subr.mxu0 0.0
    %95 = vmatpush1.msra.mxu0 0.0
    %96 = vmatprep.subr.mxu0 0.0
    %97 = vmatpush1.msra.mxu0 0.0
    %98 = vmatprep.subr.mxu0 0.0
    %99 = vmatpush1.msra.mxu0 0.0
    %100 = vmatprep.subr.mxu0 0.0
    %101 = vmatpush1.msra.mxu0 0.0
    %102 = vmatprep.subr.mxu0 0.0
    %103 = vmatpush1.msra.mxu0 0.0
    %104 = vmatprep.subr.mxu0 0.0
    %105 = vmatpush1.msra.mxu0 0.0
    %106 = vmatprep.subr.mxu0 0.0
    %107 = vmatpush1.msra.mxu0 0.0
    %108 = vmatprep.subr.mxu0 0.0
    %109 = vmatpush1.msra.mxu0 0.0
    %110 = vmatprep.subr.mxu0 0.0
    %111 = vmatpush1.msra.mxu0 0.0
    %112 = vmatprep.subr.mxu0 0.0
    %113 = vmatpush1.msra.mxu0 0.0
    %114 = vmatprep.subr.mxu0 0.0
    %115 = vmatpush1.msra.mxu0 0.0
    %116 = vmatprep.subr.mxu0 0.0
    %117 = vmatpush1.msra.mxu0 0.0
    %118 = vmatprep.subr.mxu0 0.0
    %119 = vmatpush1.msra.mxu0 0.0
    %120 = vmatprep.subr.mxu0 0.0
    %121 = vmatpush1.msra.mxu0 0.0
    %122 = vmatprep.subr.mxu0 0.0
    %123 = vmatpush1.msra.mxu0 0.0
    %124 = vmatprep.subr.mxu0 0.0
    %125 = vmatpush1.msra.mxu0 0.0
    %126 = vmatprep.subr.mxu0 0.0
    %127 = vmatpush1.msra.mxu0 0.0
    %128 = vmatprep.subr.mxu0 0.0
    %129 = vmatpush1.msra.mxu0 0.0
    %130 = vmatprep.subr.mxu0 0.0
    %131 = vmatpush1.msra.mxu0 0.0
    %132 = vmatprep.subr.mxu0 0.0
    %133 = vmatpush1.msra.mxu0 0.0
    %134 = vmatprep.subr.mxu0 0.0
    %135 = vmatpush1.msra.mxu0 0.0
    %136 = vmatprep.subr.mxu0 0.0
    %137 = vmatpush1.msra.mxu0 0.0
    %138 = vmatprep.subr.mxu0 0.0
    %139 = vmatpush1.msra.mxu0 0.0
    %140 = vmatprep.subr.mxu0 0.0
    %141 = vmatpush1.msra.mxu0 0.0
    %142 = vmatprep.subr.mxu0 0.0
    %143 = vmatpush1.msra.mxu0 0.0
    %144 = vmatprep.subr.mxu0 0.0
    %145 = vmatpush1.msra.mxu0 0.0
    %146 = vmatprep.subr.mxu0 0.0
    %147 = vmatpush1.msra.mxu0 0.0
    %148 = vmatprep.mubr.f32.mxu0 0.0
    %149 = vmatmul.mubr.f32.gmra.mrb[0].mxu0 %v82
    %v150 = vpop.f32.mrb[0].mxu0
    %v151 = vadd.f32 %v73, %v150
    %v152 = vpop.f32.mrb[0].mxu0
    %v153 = vadd.f32 %v77, %v152
    %154 = vdwg.mxu0
    %v155 = vmax.f32 %v151, 0.0
    %v156 = vmax.f32 %v153, 0.0
    %v157 = vld [vmem:[#allocation6] sm:$0xff]
    %v158 = vld [vmem:[#allocation6 + $0x8] sm:$0xff]
    %v159 = vld [vmem:[#allocation6 + $0x10] sm:$0xff]
    %v160 = vld [vmem:[#allocation6 + $0x18] sm:$0xff]
    %v161 = vld [vmem:[#allocation6 + $0x20] sm:$0xff]
    %v162 = vld [vmem:[#allocation6 + $0x28] sm:$0xff]
    %v163 = vld [vmem:[#allocation6 + $0x30] sm:$0xff]
    %v164 = vld [vmem:[#allocation6 + $0x38] sm:$0xff]
    %v165 = vld [vmem:[#allocation6 + $0x40] sm:$0xff]
    %v166 = vld [vmem:[#allocation6 + $0x48] sm:$0xff]
    %v167 = vld [vmem:[#allocation6 + $0x50] sm:$0xff]
    %v168 = vld [vmem:[#allocation6 + $0x58] sm:$0xff]
    %v169 = vld [vmem:[#allocation6 + $0x60] sm:$0xff]
    %v170 = vld [vmem:[#allocation6 + $0x68] sm:$0xff]
    %v171 = vld [vmem:[#allocation6 + $0x70] sm:$0xff]
    %v172 = vld [vmem:[#allocation6 + $0x78] sm:$0xff]
    %v173 = vld [vmem:[#allocation6 + $0x80] sm:$0xff]
    %v174 = vld [vmem:[#allocation6 + $0x88] sm:$0xff]
    %v175 = vld [vmem:[#allocation6 + $0x90] sm:$0xff]
    %v176 = vld [vmem:[#allocation6 + $0x98] sm:$0xff]
    %v177 = vld [vmem:[#allocation6 + $0xa0] sm:$0xff]
    %v178 = vld [vmem:[#allocation6 + $0xa8] sm:$0xff]
    %v179 = vld [vmem:[#allocation6 + $0xb0] sm:$0xff]
    %v180 = vld [vmem:[#allocation6 + $0xb8] sm:$0xff]
    %v181 = vld [vmem:[#allocation6 + $0xc0] sm:$0xff]
    %v182 = vld [vmem:[#allocation6 + $0xc8] sm:$0xff]
    %v183 = vld [vmem:[#allocation6 + $0xd0] sm:$0xff]
    %v184 = vld [vmem:[#allocation6 + $0xd8] sm:$0xff]
    %v185 = vld [vmem:[#allocation6 + $0xe0] sm:$0xff]
    %v186 = vld [vmem:[#allocation6 + $0xe8] sm:$0xff]
    %v187 = vld [vmem:[#allocation6 + $0xf0] sm:$0xff]
    %v188 = vld [vmem:[#allocation6 + $0xf8] sm:$0xff]
    %v189 = vld [vmem:[%s4] sm:$0x1]
    %v191 = vlaneseq
    %v192 = vshrl.u32 %v191, 7
    %v193 = vsub.s32 0, %v192
    %v194 = vrot.slane %v189, %v193
    %196 = vmatprep.subr.mxu0 0.0
    %197 = vmatpush1.msra.mxu0 %v157
    %198 = vmatprep.subr.mxu0 0.0
    %199 = vmatpush1.msra.mxu0 %v158
    %200 = vmatprep.subr.mxu0 0.0
    %201 = vmatpush1.msra.mxu0 %v159
    %202 = vmatprep.subr.mxu0 0.0
    %203 = vmatpush1.msra.mxu0 %v160
    %204 = vmatprep.subr.mxu0 0.0
    %205 = vmatpush1.msra.mxu0 %v161
    %206 = vmatprep.subr.mxu0 0.0
    %207 = vmatpush1.msra.mxu0 %v162
    %208 = vmatprep.subr.mxu0 0.0
    %209 = vmatpush1.msra.mxu0 %v163
    %210 = vmatprep.subr.mxu0 0.0
    %211 = vmatpush1.msra.mxu0 %v164
    %212 = vmatprep.subr.mxu0 0.0
    %213 = vmatpush1.msra.mxu0 %v165
    %214 = vmatprep.subr.mxu0 0.0
    %215 = vmatpush1.msra.mxu0 %v166
    %216 = vmatprep.subr.mxu0 0.0
    %217 = vmatpush1.msra.mxu0 %v167
    %218 = vmatprep.subr.mxu0 0.0
    %219 = vmatpush1.msra.mxu0 %v168
    %220 = vmatprep.subr.mxu0 0.0
    %221 = vmatpush1.msra.mxu0 %v169
    %222 = vmatprep.subr.mxu0 0.0
    %223 = vmatpush1.msra.mxu0 %v170
    %224 = vmatprep.subr.mxu0 0.0
    %225 = vmatpush1.msra.mxu0 %v171
    %226 = vmatprep.subr.mxu0 0.0
    %227 = vmatpush1.msra.mxu0 %v172
    %228 = vmatprep.subr.mxu0 0.0
    %229 = vmatpush1.msra.mxu0 %v173
    %230 = vmatprep.subr.mxu0 0.0
    %231 = vmatpush1.msra.mxu0 %v174
    %232 = vmatprep.subr.mxu0 0.0
    %233 = vmatpush1.msra.mxu0 %v175
    %234 = vmatprep.subr.mxu0 0.0
    %235 = vmatpush1.msra.mxu0 %v176
    %236 = vmatprep.subr.mxu0 0.0
    %237 = vmatpush1.msra.mxu0 %v177
    %238 = vmatprep.subr.mxu0 0.0
    %239 = vmatpush1.msra.mxu0 %v178
    %240 = vmatprep.subr.mxu0 0.0
    %241 = vmatpush1.msra.mxu0 %v179
    %242 = vmatprep.subr.mxu0 0.0
    %243 = vmatpush1.msra.mxu0 %v180
    %244 = vmatprep.subr.mxu0 0.0
    %245 = vmatpush1.msra.mxu0 %v181
    %246 = vmatprep.subr.mxu0 0.0
    %247 = vmatpush1.msra.mxu0 %v182
    %248 = vmatprep.subr.mxu0 0.0
    %249 = vmatpush1.msra.mxu0 %v183
    %250 = vmatprep.subr.mxu0 0.0
    %251 = vmatpush1.msra.mxu0 %v184
    %252 = vmatprep.subr.mxu0 0.0
    %253 = vmatpush1.msra.mxu0 %v185
    %254 = vmatprep.subr.mxu0 0.0
    %255 = vmatpush1.msra.mxu0 %v186
    %256 = vmatprep.subr.mxu0 0.0
    %257 = vmatpush1.msra.mxu0 %v187
    %258 = vmatprep.subr.mxu0 0.0
    %259 = vmatpush1.msra.mxu0 %v188
    %260 = vmatprep.mubr.f32.mxu0 %v156
    %261 = vmatmul.mubr.f32.gmra.mrb[0].mxu0 %v155
    %v262 = vpop.f32.mrb[0].mxu0
    %v263 = vadd.f32 %v194, %v262
    %v264 = vpop.f32.mrb[0].mxu0
    %265 = vdwg.mxu0
    %v266 = vlaneseq
    %v267 = vand.u32 %v266, 127
    %vm268 = vcmp.ge.s32.totalorder %v267, 16
    %vm269 = vcmp.lt.s32.totalorder %v267, 32
    %vm270 = vmand %vm268, %vm269
    %v271 = vmul.f32 %v263, 0.5
    %v272 = vmul.f32 %v271, 1.442695
    %v273 = vpow.pop %v272
    %v274 = vsel %vm270, %v273, %v263
    %275 = vst [vmem:[%s5] sm:$0xff] %v274
    // Predicated region
    $region34: #{encoder_info2_forward.1} parent=1 // pred_check
      _
    $region35: #{encoder_info2_forward.1} parent=1 // pred_check_branch
      %277 = sbr.rel (0) target = $region37
    $region36: #{encoder_info2_forward.1} parent=1 // pred_region
      _
    $region37: #{encoder_info2_forward.1} parent=1 // pred_fallthru
      _
    // Predicated region
    $region38: #{encoder_info2_forward.1} parent=1 // pred_check
      _
    $region39: #{encoder_info2_forward.1} parent=1 // pred_check_branch
      %279 = sbr.rel (0) target = $region41
    $region40: #{encoder_info2_forward.1} parent=1 // pred_region
      _
    $region41: #{encoder_info2_forward.1} parent=1 // pred_fallthru
      _
    %280 = vsyncpa [#allocation3], 1
    %281 = vsyncpa [#allocation5], 1

</llo_original>
